<compile_context>
chip_gen: v7x
topology: tpu7x:2x2x1
jax: 0.10.0
libtpu: 0.0.40
codegen_flags: <defaults>
</compile_context>

<pallas_src>
import jax
import jax.numpy as jnp
from jax.experimental import pallas as pl
from jax.experimental.pallas import tpu as pltpu

# Padded (lane-dense) sizes
F1_PAD = 256    # 14*14 = 196 conv1 outputs, padded to lane multiple
F2_PAD = 128    # 7*7   = 49  conv2 outputs, padded
H_PAD = 128     # fc hidden 32, padded
OUT_PAD = 128   # 10 classes, padded
SUBLANE = 8     # f32 sublane tile
MAX_BT = 128    # max batch rows per grid step (full MXU M-dim)


# ----------------------------------------------------------------------------
# Fused Pallas kernel: conv1 + conv2 + fc1 + fc2 + softmax
# ----------------------------------------------------------------------------
def _net_kernel(x_ref, m1_ref, b1_ref, m2_ref, b2_ref,
                w1_ref, bf1_ref, w2_ref, bf2_ref, out_ref):
    # conv1 as GEMM: (BT, 784) @ (784, 256) ; ReLU
    f1 = jnp.dot(x_ref[...], m1_ref[...],
                 preferred_element_type=jnp.float32) + b1_ref[...]
    f1 = jnp.maximum(f1, 0.0)
    # conv2 as GEMM: (BT, 256) @ (256, 128) ; ReLU  (padded rows of m2 are 0)
    f2 = jnp.dot(f1, m2_ref[...],
                 preferred_element_type=jnp.float32) + b2_ref[...]
    f2 = jnp.maximum(f2, 0.0)
    # fc1: (BT, 128) @ (128, 128) ; ReLU   (weight rows/cols zero-padded)
    h = jnp.dot(f2, w1_ref[...],
                preferred_element_type=jnp.float32) + bf1_ref[...]
    h = jnp.maximum(h, 0.0)
    # fc2: (BT, 128) @ (128, 128)
    logits = jnp.dot(h, w2_ref[...],
                     preferred_element_type=jnp.float32) + bf2_ref[...]
    # softmax over the 10 real classes; padded lanes masked out
    lane = jax.lax.broadcasted_iota(jnp.int32, logits.shape, 1)
    logits = jnp.where(lane < 10, logits, -1e30)
    z = logits - jnp.max(logits, axis=1, keepdims=True)
    e = jnp.exp(z)
    out_ref[...] = e / jnp.sum(e, axis=1, keepdims=True)


# ----------------------------------------------------------------------------
# Wrapper-side weight preparation (pure JAX, jitted together with the kernel)
# ----------------------------------------------------------------------------
def _conv_as_matrix(w_flat, H, W, OH, OW, rows_pad, cols_pad,
                    k=3, stride=2, pad=1):
    """Sparse matrix M s.t. (flat image) @ M == conv(image) flattened.

    M[si*W + sj, oi*OW + oj] = w[di*k + dj] for every valid tap; the conv's
    zero padding is handled by omitting out-of-bounds source taps.
    """
    oi, oj, di, dj = jnp.meshgrid(jnp.arange(OH), jnp.arange(OW),
                                  jnp.arange(k), jnp.arange(k), indexing="ij")
    si = stride * oi + di - pad
    sj = stride * oj + dj - pad
    valid = (si >= 0) & (si < H) & (sj >= 0) & (sj < W)
    rows = jnp.where(valid, si * W + sj, 0)
    cols = oi * OW + oj
    vals = jnp.where(valid, w_flat[di * k + dj], 0.0)
    M = jnp.zeros((rows_pad, cols_pad), jnp.float32)
    return M.at[rows.reshape(-1), cols.reshape(-1)].add(vals.reshape(-1))


@jax.jit
def net_forward(x, params):
    B = x.shape[0]
    # adaptive batch tile: sublane-aligned, up to a full 128-row MXU tile
    b8 = ((B + SUBLANE - 1) // SUBLANE) * SUBLANE
    BT = min(b8, MAX_BT)
    B_pad = ((b8 + BT - 1) // BT) * BT

    # flatten NCHW (C=1) to (B, 784), pad batch to the tile multiple
    xf = x.reshape(B, 28 * 28).astype(jnp.float32)
    xf = jnp.pad(xf, ((0, B_pad - B), (0, 0)))

    # conv weights as lane-dense GEMM matrices (conv padding folded in)
    m1 = _conv_as_matrix(params["w_conv1"], 28, 28, 14, 14, 28 * 28, F1_PAD)
    m2 = _conv_as_matrix(params["w_conv2"], 14, 14, 7, 7, F1_PAD, F2_PAD)
    b1 = jnp.zeros((1, F1_PAD), jnp.float32).at[0, :196].set(params["b_conv1"])
    b2 = jnp.zeros((1, F2_PAD), jnp.float32).at[0, :49].set(params["b_conv2"])

    # FC weights zero-padded to 128-lane shapes
    w1p = jnp.zeros((F2_PAD, H_PAD), jnp.float32).at[:49, :32].set(params["w_fc1"])
    bf1 = jnp.zeros((1, H_PAD), jnp.float32).at[0, :32].set(params["b_fc1"])
    w2p = jnp.zeros((H_PAD, OUT_PAD), jnp.float32).at[:32, :10].set(params["w_fc2"])
    bf2 = jnp.zeros((1, OUT_PAD), jnp.float32).at[0, :10].set(params["b_fc2"])

    def full(shape):
        # block index constant across grid steps -> weights DMA'd once,
        # resident in VMEM for all batch tiles
        return pl.BlockSpec(shape, lambda i: (0,) * len(shape))

    out = pl.pallas_call(
        _net_kernel,
        out_shape=jax.ShapeDtypeStruct((B_pad, OUT_PAD), jnp.float32),
        grid=(B_pad // BT,),
        in_specs=[
            pl.BlockSpec((BT, 28 * 28), lambda i: (i, 0)),   # x batch tile
            full((28 * 28, F1_PAD)), full((1, F1_PAD)),      # conv1 matrix + bias
            full((F1_PAD, F2_PAD)), full((1, F2_PAD)),       # conv2 matrix + bias
            full((F2_PAD, H_PAD)), full((1, H_PAD)),         # fc1
            full((H_PAD, OUT_PAD)), full((1, OUT_PAD)),      # fc2
        ],
        out_specs=pl.BlockSpec((BT, OUT_PAD), lambda i: (i, 0)),
        compiler_params=pltpu.CompilerParams(
            dimension_semantics=("parallel",)),               # megacore on v7x
    )(xf, m1, b1, m2, b2, w1p, bf1, w2p, bf2)

    return out[:B, :10]


# ----------------------------------------------------------------------------
# Pure-JAX reference (independent conv path) for correctness check
# ----------------------------------------------------------------------------
def net_forward_ref(x, params):
    dn = ("NCHW", "OIHW", "NCHW")
    w1 = params["w_conv1"].reshape(1, 1, 3, 3)
    f1 = jax.lax.conv_general_dilated(x, w1, (2, 2), ((1, 1), (1, 1)),
                                      dimension_numbers=dn) + params["b_conv1"]
    f1 = jnp.maximum(f1, 0.0)
    w2 = params["w_conv2"].reshape(1, 1, 3, 3)
    f2 = jax.lax.conv_general_dilated(f1, w2, (2, 2), ((1, 1), (1, 1)),
                                      dimension_numbers=dn) + params["b_conv2"]
    f2 = jnp.maximum(f2, 0.0)
    flat = f2.reshape(x.shape[0], -1)
    h = jnp.maximum(flat @ params["w_fc1"] + params["b_fc1"], 0.0)
    logits = h @ params["w_fc2"] + params["b_fc2"]
    return jax.nn.softmax(logits, axis=1)


def init_params(key):
    ks = jax.random.split(key, 8)
    f32 = jnp.float32
    return {
        # conv weights flattened row-major over (kh, kw): shape (9,)
        "w_conv1": 0.3 * jax.random.normal(ks[0], (9,), f32),
        "b_conv1": 0.1 * jax.random.normal(ks[1], (), f32),
        "w_conv2": 0.3 * jax.random.normal(ks[2], (9,), f32),
        "b_conv2": 0.1 * jax.random.normal(ks[3], (), f32),
        # Linear layers stored as (in, out) so forward is x @ W + b
        "w_fc1": 0.1 * jax.random.normal(ks[4], (49, 32), f32),
        "b_fc1": 0.05 * jax.random.normal(ks[5], (32,), f32),
        "w_fc2": 0.1 * jax.random.normal(ks[6], (32, 10), f32),
        "b_fc2": 0.05 * jax.random.normal(ks[7], (10,), f32),
    }


if __name__ == "__main__":
    key = jax.random.PRNGKey(0)
    k_x, k_p = jax.random.split(key)
    # MNIST-style input implied by the module: (B, 1, 28, 28), small batch
    x = jax.random.normal(k_x, (2, 1, 28, 28), jnp.float32)
    params = init_params(k_p)

    out = jax.block_until_ready(net_forward(x, params))
    ref = jax.block_until_ready(net_forward_ref(x, params))

    assert out.shape == (2, 10)
    assert jnp.allclose(jnp.sum(out, axis=1), 1.0, atol=1e-5)
    assert jnp.allclose(out, ref, atol=1e-5, rtol=1e-5)
    print("KERNEL_OK")
</pallas_src>

<mosaic_0001>
module attributes {stable_mosaic.version = 11 : i64} {
  func.func @_net_kernel(%arg0: i32, %arg1: memref<8x784xf32, #tpu.memory_space<vmem>>, %arg2: memref<784x256xf32, #tpu.memory_space<vmem>>, %arg3: memref<1x256xf32, #tpu.memory_space<vmem>>, %arg4: memref<256x128xf32, #tpu.memory_space<vmem>>, %arg5: memref<1x128xf32, #tpu.memory_space<vmem>>, %arg6: memref<128x128xf32, #tpu.memory_space<vmem>>, %arg7: memref<1x128xf32, #tpu.memory_space<vmem>>, %arg8: memref<128x128xf32, #tpu.memory_space<vmem>>, %arg9: memref<1x128xf32, #tpu.memory_space<vmem>>, %arg10: memref<8x128xf32, #tpu.memory_space<vmem>>) attributes {dimension_semantics = [#tpu.dimension_semantics<parallel>], iteration_bounds = array<i64: 1>, scalar_prefetch = 0 : i64, scratch_operands = 0 : i64, tpu.core_type = #tpu.core_type<tc>, window_params = [{transform_indices = @transform_0, window_bounds = array<i64: 8, 784>}, {pipeline_mode = #tpu.pipeline_mode<synchronous>, transform_indices = @transform_1, window_bounds = array<i64: 784, 256>}, {pipeline_mode = #tpu.pipeline_mode<synchronous>, transform_indices = @transform_2, window_bounds = array<i64: 1, 256>}, {pipeline_mode = #tpu.pipeline_mode<synchronous>, transform_indices = @transform_3, window_bounds = array<i64: 256, 128>}, {pipeline_mode = #tpu.pipeline_mode<synchronous>, transform_indices = @transform_4, window_bounds = array<i64: 1, 128>}, {pipeline_mode = #tpu.pipeline_mode<synchronous>, transform_indices = @transform_5, window_bounds = array<i64: 128, 128>}, {pipeline_mode = #tpu.pipeline_mode<synchronous>, transform_indices = @transform_6, window_bounds = array<i64: 1, 128>}, {pipeline_mode = #tpu.pipeline_mode<synchronous>, transform_indices = @transform_7, window_bounds = array<i64: 128, 128>}, {pipeline_mode = #tpu.pipeline_mode<synchronous>, transform_indices = @transform_8, window_bounds = array<i64: 1, 128>}, {transform_indices = @transform_9, window_bounds = array<i64: 8, 128>}]} {
    %c0 = arith.constant 0 : index
    %c0_0 = arith.constant 0 : index
    %0 = vector.load %arg1[%c0, %c0_0] : memref<8x784xf32, #tpu.memory_space<vmem>>, vector<8x784xf32>
    %c0_1 = arith.constant 0 : index
    %c0_2 = arith.constant 0 : index
    %1 = vector.load %arg2[%c0_1, %c0_2] : memref<784x256xf32, #tpu.memory_space<vmem>>, vector<784x256xf32>
    %cst = arith.constant dense<0.000000e+00> : vector<8x256xf32>
    %2 = tpu.matmul %0, %1, %cst {dimension_numbers = #tpu.dot_dimension_numbers<[1], [0], [0], [1], [0, 0, 1, 1], [], []>} : vector<8x784xf32>, vector<784x256xf32>, vector<8x256xf32> -> vector<8x256xf32>
    %c0_3 = arith.constant 0 : index
    %c0_4 = arith.constant 0 : index
    %3 = vector.load %arg3[%c0_3, %c0_4] : memref<1x256xf32, #tpu.memory_space<vmem>>, vector<1x256xf32>
    %4 = vector.broadcast %3 : vector<1x256xf32> to vector<8x256xf32>
    %5 = arith.addf %2, %4 : vector<8x256xf32>
    %cst_5 = arith.constant 0.000000e+00 : f32
    %6 = vector.broadcast %cst_5 : f32 to vector<8x256xf32>
    %7 = arith.maximumf %5, %6 : vector<8x256xf32>
    %c0_6 = arith.constant 0 : index
    %c0_7 = arith.constant 0 : index
    %8 = vector.load %arg4[%c0_6, %c0_7] : memref<256x128xf32, #tpu.memory_space<vmem>>, vector<256x128xf32>
    %cst_8 = arith.constant dense<0.000000e+00> : vector<8x128xf32>
    %9 = tpu.matmul %7, %8, %cst_8 {dimension_numbers = #tpu.dot_dimension_numbers<[1], [0], [0], [1], [0, 0, 1, 1], [], []>} : vector<8x256xf32>, vector<256x128xf32>, vector<8x128xf32> -> vector<8x128xf32>
    %c0_9 = arith.constant 0 : index
    %c0_10 = arith.constant 0 : index
    %10 = vector.load %arg5[%c0_9, %c0_10] : memref<1x128xf32, #tpu.memory_space<vmem>>, vector<1x128xf32>
    %11 = vector.broadcast %10 : vector<1x128xf32> to vector<8x128xf32>
    %12 = arith.addf %9, %11 : vector<8x128xf32>
    %cst_11 = arith.constant 0.000000e+00 : f32
    %13 = vector.broadcast %cst_11 : f32 to vector<8x128xf32>
    %14 = arith.maximumf %12, %13 : vector<8x128xf32>
    %c0_12 = arith.constant 0 : index
    %c0_13 = arith.constant 0 : index
    %15 = vector.load %arg6[%c0_12, %c0_13] : memref<128x128xf32, #tpu.memory_space<vmem>>, vector<128x128xf32>
    %cst_14 = arith.constant dense<0.000000e+00> : vector<8x128xf32>
    %16 = tpu.matmul %14, %15, %cst_14 {dimension_numbers = #tpu.dot_dimension_numbers<[1], [0], [0], [1], [0, 0, 1, 1], [], []>} : vector<8x128xf32>, vector<128x128xf32>, vector<8x128xf32> -> vector<8x128xf32>
    %c0_15 = arith.constant 0 : index
    %c0_16 = arith.constant 0 : index
    %17 = vector.load %arg7[%c0_15, %c0_16] : memref<1x128xf32, #tpu.memory_space<vmem>>, vector<1x128xf32>
    %18 = vector.broadcast %17 : vector<1x128xf32> to vector<8x128xf32>
    %19 = arith.addf %16, %18 : vector<8x128xf32>
    %cst_17 = arith.constant 0.000000e+00 : f32
    %20 = vector.broadcast %cst_17 : f32 to vector<8x128xf32>
    %21 = arith.maximumf %19, %20 : vector<8x128xf32>
    %c0_18 = arith.constant 0 : index
    %c0_19 = arith.constant 0 : index
    %22 = vector.load %arg8[%c0_18, %c0_19] : memref<128x128xf32, #tpu.memory_space<vmem>>, vector<128x128xf32>
    %cst_20 = arith.constant dense<0.000000e+00> : vector<8x128xf32>
    %23 = tpu.matmul %21, %22, %cst_20 {dimension_numbers = #tpu.dot_dimension_numbers<[1], [0], [0], [1], [0, 0, 1, 1], [], []>} : vector<8x128xf32>, vector<128x128xf32>, vector<8x128xf32> -> vector<8x128xf32>
    %c0_21 = arith.constant 0 : index
    %c0_22 = arith.constant 0 : index
    %24 = vector.load %arg9[%c0_21, %c0_22] : memref<1x128xf32, #tpu.memory_space<vmem>>, vector<1x128xf32>
    %25 = vector.broadcast %24 : vector<1x128xf32> to vector<8x128xf32>
    %26 = arith.addf %23, %25 : vector<8x128xf32>
    %27 = tpu.iota {dimensions = array<i32: 1>} : vector<8x128xi32>
    %c10_i32 = arith.constant 10 : i32
    %28 = vector.broadcast %c10_i32 : i32 to vector<8x128xi32>
    %29 = arith.cmpi slt, %27, %28 : vector<8x128xi32>
    %cst_23 = arith.constant -1.000000e+30 : f32
    %30 = vector.broadcast %cst_23 : f32 to vector<8x128xf32>
    %31 = arith.select %29, %26, %30 : vector<8x128xi1>, vector<8x128xf32>
    %cst_24 = arith.constant dense<0xFF800000> : vector<8xf32>
    %32 = vector.multi_reduction <maximumf>, %31, %cst_24 [1] : vector<8x128xf32> to vector<8xf32>
    %33 = vector.shape_cast %32 : vector<8xf32> to vector<8x1xf32>
    %34 = vector.broadcast %33 : vector<8x1xf32> to vector<8x128xf32>
    %35 = arith.subf %31, %34 : vector<8x128xf32>
    %36 = math.exp %35 : vector<8x128xf32>
    %cst_25 = arith.constant dense<0.000000e+00> : vector<8xf32>
    %37 = vector.multi_reduction <add>, %36, %cst_25 [1] : vector<8x128xf32> to vector<8xf32>
    %38 = vector.shape_cast %37 : vector<8xf32> to vector<8x1xf32>
    %39 = vector.broadcast %38 : vector<8x1xf32> to vector<8x128xf32>
    %40 = arith.divf %36, %39 : vector<8x128xf32>
    %c0_26 = arith.constant 0 : index
    %c0_27 = arith.constant 0 : index
    %41 = vector.load %arg10[%c0_26, %c0_27] : memref<8x128xf32, #tpu.memory_space<vmem>>, vector<8x128xf32>
    tpu.vector_store %arg10[%c0_26, %c0_27], %40 {strides = array<i32>} : memref<8x128xf32, #tpu.memory_space<vmem>>, vector<8x128xf32>,
    return
  }
  func.func @transform_0(%arg0: i32) -> (i32, i32) {
    %c0_i32 = arith.constant 0 : i32
    %c0_i32_0 = arith.constant 0 : i32
    return %arg0, %c0_i32 : i32, i32
  }
  func.func @transform_1(%arg0: i32) -> (i32, i32) {
    %c0_i32 = arith.constant 0 : i32
    %c0_i32_0 = arith.constant 0 : i32
    %c0_i32_1 = arith.constant 0 : i32
    return %c0_i32, %c0_i32_0 : i32, i32
  }
  func.func @transform_2(%arg0: i32) -> (i32, i32) {
    %c0_i32 = arith.constant 0 : i32
    %c0_i32_0 = arith.constant 0 : i32
    %c0_i32_1 = arith.constant 0 : i32
    return %c0_i32, %c0_i32_0 : i32, i32
  }
  func.func @transform_3(%arg0: i32) -> (i32, i32) {
    %c0_i32 = arith.constant 0 : i32
    %c0_i32_0 = arith.constant 0 : i32
    %c0_i32_1 = arith.constant 0 : i32
    return %c0_i32, %c0_i32_0 : i32, i32
  }
  func.func @transform_4(%arg0: i32) -> (i32, i32) {
    %c0_i32 = arith.constant 0 : i32
    %c0_i32_0 = arith.constant 0 : i32
    %c0_i32_1 = arith.constant 0 : i32
    return %c0_i32, %c0_i32_0 : i32, i32
  }
  func.func @transform_5(%arg0: i32) -> (i32, i32) {
    %c0_i32 = arith.constant 0 : i32
    %c0_i32_0 = arith.constant 0 : i32
    %c0_i32_1 = arith.constant 0 : i32
    return %c0_i32, %c0_i32_0 : i32, i32
  }
  func.func @transform_6(%arg0: i32) -> (i32, i32) {
    %c0_i32 = arith.constant 0 : i32
    %c0_i32_0 = arith.constant 0 : i32
    %c0_i32_1 = arith.constant 0 : i32
    return %c0_i32, %c0_i32_0 : i32, i32
  }
  func.func @transform_7(%arg0: i32) -> (i32, i32) {
    %c0_i32 = arith.constant 0 : i32
    %c0_i32_0 = arith.constant 0 : i32
    %c0_i32_1 = arith.constant 0 : i32
    return %c0_i32, %c0_i32_0 : i32, i32
  }
  func.func @transform_8(%arg0: i32) -> (i32, i32) {
    %c0_i32 = arith.constant 0 : i32
    %c0_i32_0 = arith.constant 0 : i32
    %c0_i32_1 = arith.constant 0 : i32
    return %c0_i32, %c0_i32_0 : i32, i32
  }
  func.func @transform_9(%arg0: i32) -> (i32, i32) {
    %c0_i32 = arith.constant 0 : i32
    %c0_i32_0 = arith.constant 0 : i32
    return %arg0, %c0_i32 : i32, i32
  }
}

</mosaic_0001>

<llo_original>
// kernel: net_forward.1
$region0: #{net_forward.1}
  #allocation0 [shape = 'u32[]', space=smem, size = 0x4, offset = 0x4, fixed_abs, tag = 'smem constant byte address 0x4 - core index']
  #allocation1 [shape = 'u32[144,128]{1,0:T(1,128)}', space=vmem, size = 0x12000, scoped, tag = 'internal scratch']
  %s0 = inlined_call_operand.vmem [shape: f32[8,784], index: 0, kind: input, shape index: {}]
  %s1 = inlined_call_operand.vmem [shape: f32[784,256], index: 1, kind: input, shape index: {}]
  %s2 = inlined_call_operand.vmem [shape: f32[1,256], index: 2, kind: input, shape index: {}]
  %s3 = inlined_call_operand.vmem [shape: f32[256,128], index: 3, kind: input, shape index: {}]
  %s4 = inlined_call_operand.vmem [shape: f32[1,128], index: 4, kind: input, shape index: {}]
  %s5 = inlined_call_operand.vmem [shape: f32[128,128], index: 5, kind: input, shape index: {}]
  %s6 = inlined_call_operand.vmem [shape: f32[1,128], index: 6, kind: input, shape index: {}]
  %s7 = inlined_call_operand.vmem [shape: f32[128,128], index: 7, kind: input, shape index: {}]
  %s8 = inlined_call_operand.vmem [shape: f32[1,128], index: 8, kind: input, shape index: {}]
  %s9 = inlined_call_operand.vmem [shape: f32[8,128], index: 9, kind: output, shape index: {}]
  %s10 = sld [smem:[#allocation0]]
  $region46: #{net_forward.1} parent=0
    _
  %s12 = ssub.s32 1, %s10
  %s13 = scalar_select 0, %s12, %s10
  // Predicated region
  $region2: #{net_forward.1} parent=0 // pred_check
    _
  $region3: #{net_forward.1} parent=0 // pred_check_branch
    %15 = sbr.rel (0) target = $region5
  $region4: #{net_forward.1} parent=0 // pred_region
    _
  $region5: #{net_forward.1} parent=0 // pred_fallthru
    _
  // Predicated region
  $region6: #{net_forward.1} parent=0 // pred_check
    _
  $region7: #{net_forward.1} parent=0 // pred_check_branch
    %17 = sbr.rel (0) target = $region9
  $region8: #{net_forward.1} parent=0 // pred_region
    _
  $region9: #{net_forward.1} parent=0 // pred_fallthru
    _
  // Predicated region
  $region10: #{net_forward.1} parent=0 // pred_check
    _
  $region11: #{net_forward.1} parent=0 // pred_check_branch
    %19 = sbr.rel (0) target = $region13
  $region12: #{net_forward.1} parent=0 // pred_region
    _
  $region13: #{net_forward.1} parent=0 // pred_fallthru
    _
  // Predicated region
  $region14: #{net_forward.1} parent=0 // pred_check
    _
  $region15: #{net_forward.1} parent=0 // pred_check_branch
    %21 = sbr.rel (0) target = $region17
  $region16: #{net_forward.1} parent=0 // pred_region
    _
  $region17: #{net_forward.1} parent=0 // pred_fallthru
    _
  // Predicated region
  $region18: #{net_forward.1} parent=0 // pred_check
    _
  $region19: #{net_forward.1} parent=0 // pred_check_branch
    %23 = sbr.rel (0) target = $region21
  $region20: #{net_forward.1} parent=0 // pred_region
    _
  $region21: #{net_forward.1} parent=0 // pred_fallthru
    _
  // Predicated region
  $region22: #{net_forward.1} parent=0 // pred_check
    _
  $region23: #{net_forward.1} parent=0 // pred_check_branch
    %25 = sbr.rel (0) target = $region25
  $region24: #{net_forward.1} parent=0 // pred_region
    _
  $region25: #{net_forward.1} parent=0 // pred_fallthru
    _
  // Predicated region
  $region26: #{net_forward.1} parent=0 // pred_check
    _
  $region27: #{net_forward.1} parent=0 // pred_check_branch
    %27 = sbr.rel (0) target = $region29
  $region28: #{net_forward.1} parent=0 // pred_region
    _
  $region29: #{net_forward.1} parent=0 // pred_fallthru
    _
  // Predicated region
  $region30: #{net_forward.1} parent=0 // pred_check
    _
  $region31: #{net_forward.1} parent=0 // pred_check_branch
    %29 = sbr.rel (0) target = $region33
  $region32: #{net_forward.1} parent=0 // pred_region
    _
  $region33: #{net_forward.1} parent=0 // pred_fallthru
    _
  // Predicated region
  $region34: #{net_forward.1} parent=0 // pred_check
    _
  $region35: #{net_forward.1} parent=0 // pred_check_branch
    %31 = sbr.rel (0) target = $region37
  $region36: #{net_forward.1} parent=0 // pred_region
    _
  $region37: #{net_forward.1} parent=0 // pred_fallthru
    _
  %v32 = vld [vmem:[%s0] sm:$0xff]
  %v33 = vld [vmem:[%s0 + $0x8] sm:$0xff]
  %v34 = vld [vmem:[%s0 + $0x10] sm:$0xff]
  %v35 = vld [vmem:[%s0 + $0x18] sm:$0xff]
  %v36 = vld [vmem:[%s0 + $0x20] sm:$0xff]
  %v37 = vld [vmem:[%s0 + $0x28] sm:$0xff]
  %v38 = vld [vmem:[%s0 + $0x30] sm:$0xff]
  %v39 = vld [vmem:[%s1] sm:$0xff]
  %v40 = vld [vmem:[%s1 + $0x8] sm:$0xff]
  %v41 = vld [vmem:[%s1 + $0x10] sm:$0xff]
  %v42 = vld [vmem:[%s1 + $0x18] sm:$0xff]
  %v43 = vld [vmem:[%s1 + $0x20] sm:$0xff]
  %v44 = vld [vmem:[%s1 + $0x28] sm:$0xff]
  %v45 = vld [vmem:[%s1 + $0x30] sm:$0xff]
  %v46 = vld [vmem:[%s1 + $0x38] sm:$0xff]
  %v47 = vld [vmem:[%s1 + $0x40] sm:$0xff]
  %v48 = vld [vmem:[%s1 + $0x48] sm:$0xff]
  %v49 = vld [vmem:[%s1 + $0x50] sm:$0xff]
  %v50 = vld [vmem:[%s1 + $0x58] sm:$0xff]
  %v51 = vld [vmem:[%s1 + $0x60] sm:$0xff]
  %v52 = vld [vmem:[%s1 + $0x68] sm:$0xff]
  %v53 = vld [vmem:[%s1 + $0x70] sm:$0xff]
  %v54 = vld [vmem:[%s1 + $0x78] sm:$0xff]
  %v55 = vld [vmem:[%s1 + $0x80] sm:$0xff]
  %v56 = vld [vmem:[%s1 + $0x88] sm:$0xff]
  %v57 = vld [vmem:[%s1 + $0x90] sm:$0xff]
  %v58 = vld [vmem:[%s1 + $0x98] sm:$0xff]
  %v59 = vld [vmem:[%s1 + $0xa0] sm:$0xff]
  %v60 = vld [vmem:[%s1 + $0xa8] sm:$0xff]
  %v61 = vld [vmem:[%s1 + $0xb0] sm:$0xff]
  %v62 = vld [vmem:[%s1 + $0xb8] sm:$0xff]
  %v63 = vld [vmem:[%s1 + $0xc0] sm:$0xff]
  %v64 = vld [vmem:[%s1 + $0xc8] sm:$0xff]
  %v65 = vld [vmem:[%s1 + $0xd0] sm:$0xff]
  %v66 = vld [vmem:[%s1 + $0xd8] sm:$0xff]
  %v67 = vld [vmem:[%s1 + $0xe0] sm:$0xff]
  %v68 = vld [vmem:[%s1 + $0xe8] sm:$0xff]
  %v69 = vld [vmem:[%s1 + $0xf0] sm:$0xff]
  %v70 = vld [vmem:[%s1 + $0xf8] sm:$0xff]
  %v71 = vld [vmem:[%s1 + $0x100] sm:$0xff]
  %v72 = vld [vmem:[%s1 + $0x108] sm:$0xff]
  %v73 = vld [vmem:[%s1 + $0x110] sm:$0xff]
  %v74 = vld [vmem:[%s1 + $0x118] sm:$0xff]
  %v75 = vld [vmem:[%s1 + $0x120] sm:$0xff]
  %v76 = vld [vmem:[%s1 + $0x128] sm:$0xff]
  %v77 = vld [vmem:[%s1 + $0x130] sm:$0xff]
  %v78 = vld [vmem:[%s1 + $0x138] sm:$0xff]
  %v79 = vld [vmem:[%s1 + $0x140] sm:$0xff]
  %v80 = vld [vmem:[%s1 + $0x148] sm:$0xff]
  %v81 = vld [vmem:[%s1 + $0x150] sm:$0xff]
  %v82 = vld [vmem:[%s1 + $0x158] sm:$0xff]
  %v83 = vld [vmem:[%s1 + $0x160] sm:$0xff]
  %v84 = vld [vmem:[%s1 + $0x168] sm:$0xff]
  %v85 = vld [vmem:[%s1 + $0x170] sm:$0xff]
  %v86 = vld [vmem:[%s1 + $0x178] sm:$0xff]
  %v87 = vld [vmem:[%s1 + $0x180] sm:$0xff]
  %v88 = vld [vmem:[%s1 + $0x188] sm:$0xff]
  %v89 = vld [vmem:[%s1 + $0x190] sm:$0xff]
  %v90 = vld [vmem:[%s1 + $0x198] sm:$0xff]
  %v91 = vld [vmem:[%s1 + $0x1a0] sm:$0xff]
  %v92 = vld [vmem:[%s1 + $0x1a8] sm:$0xff]
  %v93 = vld [vmem:[%s1 + $0x1b0] sm:$0xff]
  %v94 = vld [vmem:[%s1 + $0x1b8] sm:$0xff]
  %v95 = vld [vmem:[%s1 + $0x1c0] sm:$0xff]
  %v96 = vld [vmem:[%s1 + $0x1c8] sm:$0xff]
  %v97 = vld [vmem:[%s1 + $0x1d0] sm:$0xff]
  %v98 = vld [vmem:[%s1 + $0x1d8] sm:$0xff]
  %v99 = vld [vmem:[%s1 + $0x1e0] sm:$0xff]
  %v100 = vld [vmem:[%s1 + $0x1e8] sm:$0xff]
  %v101 = vld [vmem:[%s1 + $0x1f0] sm:$0xff]
  %v102 = vld [vmem:[%s1 + $0x1f8] sm:$0xff]
  %v103 = vld [vmem:[%s1 + $0x200] sm:$0xff]
  %v104 = vld [vmem:[%s1 + $0x208] sm:$0xff]
  %v105 = vld [vmem:[%s1 + $0x210] sm:$0xff]
  %v106 = vld [vmem:[%s1 + $0x218] sm:$0xff]
  %v107 = vld [vmem:[%s1 + $0x220] sm:$0xff]
  %v108 = vld [vmem:[%s1 + $0x228] sm:$0xff]
  %v109 = vld [vmem:[%s1 + $0x230] sm:$0xff]
  %v110 = vld [vmem:[%s1 + $0x238] sm:$0xff]
  %v111 = vld [vmem:[%s1 + $0x240] sm:$0xff]
  %v112 = vld [vmem:[%s1 + $0x248] sm:$0xff]
  %v113 = vld [vmem:[%s1 + $0x250] sm:$0xff]
  %v114 = vld [vmem:[%s1 + $0x258] sm:$0xff]
  %v115 = vld [vmem:[%s1 + $0x260] sm:$0xff]
  %v116 = vld [vmem:[%s1 + $0x268] sm:$0xff]
  %v117 = vld [vmem:[%s1 + $0x270] sm:$0xff]
  %v118 = vld [vmem:[%s1 + $0x278] sm:$0xff]
  %v119 = vld [vmem:[%s1 + $0x280] sm:$0xff]
  %v120 = vld [vmem:[%s1 + $0x288] sm:$0xff]
  %v121 = vld [vmem:[%s1 + $0x290] sm:$0xff]
  %v122 = vld [vmem:[%s1 + $0x298] sm:$0xff]
  %v123 = vld [vmem:[%s1 + $0x2a0] sm:$0xff]
  %v124 = vld [vmem:[%s1 + $0x2a8] sm:$0xff]
  %v125 = vld [vmem:[%s1 + $0x2b0] sm:$0xff]
  %v126 = vld [vmem:[%s1 + $0x2b8] sm:$0xff]
  %v127 = vld [vmem:[%s1 + $0x2c0] sm:$0xff]
  %v128 = vld [vmem:[%s1 + $0x2c8] sm:$0xff]
  %v129 = vld [vmem:[%s1 + $0x2d0] sm:$0xff]
  %v130 = vld [vmem:[%s1 + $0x2d8] sm:$0xff]
  %v131 = vld [vmem:[%s1 + $0x2e0] sm:$0xff]
  %v132 = vld [vmem:[%s1 + $0x2e8] sm:$0xff]
  %v133 = vld [vmem:[%s1 + $0x2f0] sm:$0xff]
  %v134 = vld [vmem:[%s1 + $0x2f8] sm:$0xff]
  %v135 = vld [vmem:[%s1 + $0x300] sm:$0xff]
  %v136 = vld [vmem:[%s1 + $0x308] sm:$0xff]
  %v137 = vld [vmem:[%s1 + $0x310] sm:$0xff]
  %v138 = vld [vmem:[%s1 + $0x318] sm:$0xff]
  %v139 = vld [vmem:[%s1 + $0x320] sm:$0xff]
  %v140 = vld [vmem:[%s1 + $0x328] sm:$0xff]
  %v141 = vld [vmem:[%s1 + $0x330] sm:$0xff]
  %v142 = vld [vmem:[%s1 + $0x338] sm:$0xff]
  %v143 = vld [vmem:[%s1 + $0x340] sm:$0xff]
  %v144 = vld [vmem:[%s1 + $0x348] sm:$0xff]
  %v145 = vld [vmem:[%s1 + $0x350] sm:$0xff]
  %v146 = vld [vmem:[%s1 + $0x358] sm:$0xff]
  %v147 = vld [vmem:[%s1 + $0x360] sm:$0xff]
  %v148 = vld [vmem:[%s1 + $0x368] sm:$0xff]
  %v149 = vld [vmem:[%s1 + $0x370] sm:$0xff]
  %v150 = vld [vmem:[%s1 + $0x378] sm:$0xff]
  %v151 = vld [vmem:[%s1 + $0x380] sm:$0xff]
  %v152 = vld [vmem:[%s1 + $0x388] sm:$0xff]
  %v153 = vld [vmem:[%s1 + $0x390] sm:$0xff]
  %v154 = vld [vmem:[%s1 + $0x398] sm:$0xff]
  %v155 = vld [vmem:[%s1 + $0x3a0] sm:$0xff]
  %v156 = vld [vmem:[%s1 + $0x3a8] sm:$0xff]
  %v157 = vld [vmem:[%s1 + $0x3b0] sm:$0xff]
  %v158 = vld [vmem:[%s1 + $0x3b8] sm:$0xff]
  %v159 = vld [vmem:[%s1 + $0x3c0] sm:$0xff]
  %v160 = vld [vmem:[%s1 + $0x3c8] sm:$0xff]
  %v161 = vld [vmem:[%s1 + $0x3d0] sm:$0xff]
  %v162 = vld [vmem:[%s1 + $0x3d8] sm:$0xff]
  %v163 = vld [vmem:[%s1 + $0x3e0] sm:$0xff]
  %v164 = vld [vmem:[%s1 + $0x3e8] sm:$0xff]
  %v165 = vld [vmem:[%s1 + $0x3f0] sm:$0xff]
  %v166 = vld [vmem:[%s1 + $0x3f8] sm:$0xff]
  %v167 = vld [vmem:[%s1 + $0x400] sm:$0xff]
  %v168 = vld [vmem:[%s1 + $0x408] sm:$0xff]
  %v169 = vld [vmem:[%s1 + $0x410] sm:$0xff]
  %v170 = vld [vmem:[%s1 + $0x418] sm:$0xff]
  %v171 = vld [vmem:[%s1 + $0x420] sm:$0xff]
  %v172 = vld [vmem:[%s1 + $0x428] sm:$0xff]
  %v173 = vld [vmem:[%s1 + $0x430] sm:$0xff]
  %v174 = vld [vmem:[%s1 + $0x438] sm:$0xff]
  %v175 = vld [vmem:[%s1 + $0x440] sm:$0xff]
  %v176 = vld [vmem:[%s1 + $0x448] sm:$0xff]
  %v177 = vld [vmem:[%s1 + $0x450] sm:$0xff]
  %v178 = vld [vmem:[%s1 + $0x458] sm:$0xff]
  %v179 = vld [vmem:[%s1 + $0x460] sm:$0xff]
  %v180 = vld [vmem:[%s1 + $0x468] sm:$0xff]
  %v181 = vld [vmem:[%s1 + $0x470] sm:$0xff]
  %v182 = vld [vmem:[%s1 + $0x478] sm:$0xff]
  %v183 = vld [vmem:[%s1 + $0x480] sm:$0xff]
  %v184 = vld [vmem:[%s1 + $0x488] sm:$0xff]
  %v185 = vld [vmem:[%s1 + $0x490] sm:$0xff]
  %v186 = vld [vmem:[%s1 + $0x498] sm:$0xff]
  %v187 = vld [vmem:[%s1 + $0x4a0] sm:$0xff]
  %v188 = vld [vmem:[%s1 + $0x4a8] sm:$0xff]
  %v189 = vld [vmem:[%s1 + $0x4b0] sm:$0xff]
  %v190 = vld [vmem:[%s1 + $0x4b8] sm:$0xff]
  %v191 = vld [vmem:[%s1 + $0x4c0] sm:$0xff]
  %v192 = vld [vmem:[%s1 + $0x4c8] sm:$0xff]
  %v193 = vld [vmem:[%s1 + $0x4d0] sm:$0xff]
  %v194 = vld [vmem:[%s1 + $0x4d8] sm:$0xff]
  %v195 = vld [vmem:[%s1 + $0x4e0] sm:$0xff]
  %v196 = vld [vmem:[%s1 + $0x4e8] sm:$0xff]
  %v197 = vld [vmem:[%s1 + $0x4f0] sm:$0xff]
  %v198 = vld [vmem:[%s1 + $0x4f8] sm:$0xff]
  %v199 = vld [vmem:[%s1 + $0x500] sm:$0xff]
  %v200 = vld [vmem:[%s1 + $0x508] sm:$0xff]
  %v201 = vld [vmem:[%s1 + $0x510] sm:$0xff]
  %v202 = vld [vmem:[%s1 + $0x518] sm:$0xff]
  %v203 = vld [vmem:[%s1 + $0x520] sm:$0xff]
  %v204 = vld [vmem:[%s1 + $0x528] sm:$0xff]
  %v205 = vld [vmem:[%s1 + $0x530] sm:$0xff]
  %v206 = vld [vmem:[%s1 + $0x538] sm:$0xff]
  %v207 = vld [vmem:[%s1 + $0x540] sm:$0xff]
  %v208 = vld [vmem:[%s1 + $0x548] sm:$0xff]
  %v209 = vld [vmem:[%s1 + $0x550] sm:$0xff]
  %v210 = vld [vmem:[%s1 + $0x558] sm:$0xff]
  %v211 = vld [vmem:[%s1 + $0x560] sm:$0xff]
  %v212 = vld [vmem:[%s1 + $0x568] sm:$0xff]
  %v213 = vld [vmem:[%s1 + $0x570] sm:$0xff]
  %v214 = vld [vmem:[%s1 + $0x578] sm:$0xff]
  %v215 = vld [vmem:[%s1 + $0x580] sm:$0xff]
  %v216 = vld [vmem:[%s1 + $0x588] sm:$0xff]
  %v217 = vld [vmem:[%s1 + $0x590] sm:$0xff]
  %v218 = vld [vmem:[%s1 + $0x598] sm:$0xff]
  %v219 = vld [vmem:[%s1 + $0x5a0] sm:$0xff]
  %v220 = vld [vmem:[%s1 + $0x5a8] sm:$0xff]
  %v221 = vld [vmem:[%s1 + $0x5b0] sm:$0xff]
  %v222 = vld [vmem:[%s1 + $0x5b8] sm:$0xff]
  %v223 = vld [vmem:[%s1 + $0x5c0] sm:$0xff]
  %v224 = vld [vmem:[%s1 + $0x5c8] sm:$0xff]
  %v225 = vld [vmem:[%s1 + $0x5d0] sm:$0xff]
  %v226 = vld [vmem:[%s1 + $0x5d8] sm:$0xff]
  %v227 = vld [vmem:[%s1 + $0x5e0] sm:$0xff]
  %v228 = vld [vmem:[%s1 + $0x5e8] sm:$0xff]
  %v229 = vld [vmem:[%s1 + $0x5f0] sm:$0xff]
  %v230 = vld [vmem:[%s1 + $0x5f8] sm:$0xff]
  %v231 = vld [vmem:[%s1 + $0x600] sm:$0xff]
  %v232 = vld [vmem:[%s1 + $0x608] sm:$0xff]
  %v233 = vld [vmem:[%s1 + $0x610] sm:$0xff]
  %v234 = vld [vmem:[%s1 + $0x618] sm:$0xff]
  %v235 = vld [vmem:[%s2] sm:$0x3]
  %v237 = vlaneseq
  %v238 = vshrl.u32 %v237, 7
  %v239 = vsub.s32 0, %v238
  %v240 = vrot.slane %v235, %v239
  %v241 = vlaneseq
  %v242 = vshrl.u32 %v241, 7
  %v243 = vsub.s32 1, %v242
  %v244 = vrot.slane %v235, %v243
  %vm247 = vcmask 130048
  %v249 = vsel %vm247, %v38, 0
  %251 = vmatprep.subr.mxu0 %v40
  %252 = vmatpush1.msra.mxu0 %v39
  %253 = vmatprep.subr.mxu0 %v42
  %254 = vmatpush1.msra.mxu0 %v41
  %255 = vmatprep.subr.mxu0 %v44
  %256 = vmatpush1.msra.mxu0 %v43
  %257 = vmatprep.subr.mxu0 %v46
  %258 = vmatpush1.msra.mxu0 %v45
  %259 = vmatprep.subr.mxu0 %v48
  %260 = vmatpush1.msra.mxu0 %v47
  %261 = vmatprep.subr.mxu0 %v50
  %262 = vmatpush1.msra.mxu0 %v49
  %263 = vmatprep.subr.mxu0 %v52
  %264 = vmatpush1.msra.mxu0 %v51
  %265 = vmatprep.subr.mxu0 %v54
  %266 = vmatpush1.msra.mxu0 %v53
  %267 = vmatprep.subr.mxu0 %v56
  %268 = vmatpush1.msra.mxu0 %v55
  %269 = vmatprep.subr.mxu0 %v58
  %270 = vmatpush1.msra.mxu0 %v57
  %271 = vmatprep.subr.mxu0 %v60
  %272 = vmatpush1.msra.mxu0 %v59
  %273 = vmatprep.subr.mxu0 %v62
  %274 = vmatpush1.msra.mxu0 %v61
  %275 = vmatprep.subr.mxu0 %v64
  %276 = vmatpush1.msra.mxu0 %v63
  %277 = vmatprep.subr.mxu0 %v66
  %278 = vmatpush1.msra.mxu0 %v65
  %279 = vmatprep.subr.mxu0 %v68
  %280 = vmatpush1.msra.mxu0 %v67
  %281 = vmatprep.subr.mxu0 %v70
  %282 = vmatpush1.msra.mxu0 %v69
  %283 = vmatprep.subr.mxu0 %v72
  %284 = vmatpush1.msra.mxu0 %v71
  %285 = vmatprep.subr.mxu0 %v74
  %286 = vmatpush1.msra.mxu0 %v73
  %287 = vmatprep.subr.mxu0 %v76
  %288 = vmatpush1.msra.mxu0 %v75
  %289 = vmatprep.subr.mxu0 %v78
  %290 = vmatpush1.msra.mxu0 %v77
  %291 = vmatprep.subr.mxu0 %v80
  %292 = vmatpush1.msra.mxu0 %v79
  %293 = vmatprep.subr.mxu0 %v82
  %294 = vmatpush1.msra.mxu0 %v81
  %295 = vmatprep.subr.mxu0 %v84
  %296 = vmatpush1.msra.mxu0 %v83
  %297 = vmatprep.subr.mxu0 %v86
  %298 = vmatpush1.msra.mxu0 %v85
  %299 = vmatprep.subr.mxu0 %v88
  %300 = vmatpush1.msra.mxu0 %v87
  %301 = vmatprep.subr.mxu0 %v90
  %302 = vmatpush1.msra.mxu0 %v89
  %303 = vmatprep.subr.mxu0 %v92
  %304 = vmatpush1.msra.mxu0 %v91
  %305 = vmatprep.subr.mxu0 %v94
  %306 = vmatpush1.msra.mxu0 %v93
  %307 = vmatprep.subr.mxu0 %v96
  %308 = vmatpush1.msra.mxu0 %v95
  %309 = vmatprep.subr.mxu0 %v98
  %310 = vmatpush1.msra.mxu0 %v97
  %311 = vmatprep.subr.mxu0 %v100
  %312 = vmatpush1.msra.mxu0 %v99
  %313 = vmatprep.subr.mxu0 %v102
  %314 = vmatpush1.msra.mxu0 %v101
  %315 = vmatprep.mubr.f32.mxu0 %v33
  %316 = vmatmul.mubr.f32.gmra.mrb[0].mxu0 %v32
  %v317 = vpop.f32.mrb[0].mxu0
  %v318 = vadd.f32 %v240, %v317
  %v319 = vpop.f32.mrb[0].mxu0
  %v320 = vadd.f32 %v244, %v319
  %321 = vdwg.mxu0
  %322 = vmatprep.subr.mxu0 %v104
  %323 = vmatpush1.msra.mxu0 %v103
  %324 = vmatprep.subr.mxu0 %v106
  %325 = vmatpush1.msra.mxu0 %v105
  %326 = vmatprep.subr.mxu0 %v108
  %327 = vmatpush1.msra.mxu0 %v107
  %328 = vmatprep.subr.mxu0 %v110
  %329 = vmatpush1.msra.mxu0 %v109
  %330 = vmatprep.subr.mxu0 %v112
  %331 = vmatpush1.msra.mxu0 %v111
  %332 = vmatprep.subr.mxu0 %v114
  %333 = vmatpush1.msra.mxu0 %v113
  %334 = vmatprep.subr.mxu0 %v116
  %335 = vmatpush1.msra.mxu0 %v115
  %336 = vmatprep.subr.mxu0 %v118
  %337 = vmatpush1.msra.mxu0 %v117
  %338 = vmatprep.subr.mxu0 %v120
  %339 = vmatpush1.msra.mxu0 %v119
  %340 = vmatprep.subr.mxu0 %v122
  %341 = vmatpush1.msra.mxu0 %v121
  %342 = vmatprep.subr.mxu0 %v124
  %343 = vmatpush1.msra.mxu0 %v123
  %344 = vmatprep.subr.mxu0 %v126
  %345 = vmatpush1.msra.mxu0 %v125
  %346 = vmatprep.subr.mxu0 %v128
  %347 = vmatpush1.msra.mxu0 %v127
  %348 = vmatprep.subr.mxu0 %v130
  %349 = vmatpush1.msra.mxu0 %v129
  %350 = vmatprep.subr.mxu0 %v132
  %351 = vmatpush1.msra.mxu0 %v131
  %352 = vmatprep.subr.mxu0 %v134
  %353 = vmatpush1.msra.mxu0 %v133
  %354 = vmatprep.subr.mxu0 %v136
  %355 = vmatpush1.msra.mxu0 %v135
  %356 = vmatprep.subr.mxu0 %v138
  %357 = vmatpush1.msra.mxu0 %v137
  %358 = vmatprep.subr.mxu0 %v140
  %359 = vmatpush1.msra.mxu0 %v139
  %360 = vmatprep.subr.mxu0 %v142
  %361 = vmatpush1.msra.mxu0 %v141
  %362 = vmatprep.subr.mxu0 %v144
  %363 = vmatpush1.msra.mxu0 %v143
  %364 = vmatprep.subr.mxu0 %v146
  %365 = vmatpush1.msra.mxu0 %v145
  %366 = vmatprep.subr.mxu0 %v148
  %367 = vmatpush1.msra.mxu0 %v147
  %368 = vmatprep.subr.mxu0 %v150
  %369 = vmatpush1.msra.mxu0 %v149
  %370 = vmatprep.subr.mxu0 %v152
  %371 = vmatpush1.msra.mxu0 %v151
  %372 = vmatprep.subr.mxu0 %v154
  %373 = vmatpush1.msra.mxu0 %v153
  %374 = vmatprep.subr.mxu0 %v156
  %375 = vmatpush1.msra.mxu0 %v155
  %376 = vmatprep.subr.mxu0 %v158
  %377 = vmatpush1.msra.mxu0 %v157
  %378 = vmatprep.subr.mxu0 %v160
  %379 = vmatpush1.msra.mxu0 %v159
  %380 = vmatprep.subr.mxu0 %v162
  %381 = vmatpush1.msra.mxu0 %v161
  %382 = vmatprep.subr.mxu0 %v164
  %383 = vmatpush1.msra.mxu0 %v163
  %384 = vmatprep.subr.mxu0 %v166
  %385 = vmatpush1.msra.mxu0 %v165
  %386 = vmatprep.mubr.f32.mxu0 %v35
  %387 = vmatmul.mubr.f32.gmra.mrb[0].mxu0 %v34
  %v388 = vpop.f32.mrb[0].mxu0
  %v389 = vadd.f32 %v318, %v388
  %v390 = vpop.f32.mrb[0].mxu0
  %v391 = vadd.f32 %v320, %v390
  %392 = vdwg.mxu0
  %393 = vmatprep.subr.mxu0 %v168
  %394 = vmatpush1.msra.mxu0 %v167
  %395 = vmatprep.subr.mxu0 %v170
  %396 = vmatpush1.msra.mxu0 %v169
  %397 = vmatprep.subr.mxu0 %v172
  %398 = vmatpush1.msra.mxu0 %v171
  %399 = vmatprep.subr.mxu0 %v174
  %400 = vmatpush1.msra.mxu0 %v173
  %401 = vmatprep.subr.mxu0 %v176
  %402 = vmatpush1.msra.mxu0 %v175
  %403 = vmatprep.subr.mxu0 %v178
  %404 = vmatpush1.msra.mxu0 %v177
  %405 = vmatprep.subr.mxu0 %v180
  %406 = vmatpush1.msra.mxu0 %v179
  %407 = vmatprep.subr.mxu0 %v182
  %408 = vmatpush1.msra.mxu0 %v181
  %409 = vmatprep.subr.mxu0 %v184
  %410 = vmatpush1.msra.mxu0 %v183
  %411 = vmatprep.subr.mxu0 %v186
  %412 = vmatpush1.msra.mxu0 %v185
  %413 = vmatprep.subr.mxu0 %v188
  %414 = vmatpush1.msra.mxu0 %v187
  %415 = vmatprep.subr.mxu0 %v190
  %416 = vmatpush1.msra.mxu0 %v189
  %417 = vmatprep.subr.mxu0 %v192
  %418 = vmatpush1.msra.mxu0 %v191
  %419 = vmatprep.subr.mxu0 %v194
  %420 = vmatpush1.msra.mxu0 %v193
  %421 = vmatprep.subr.mxu0 %v196
  %422 = vmatpush1.msra.mxu0 %v195
  %423 = vmatprep.subr.mxu0 %v198
  %424 = vmatpush1.msra.mxu0 %v197
  %425 = vmatprep.subr.mxu0 %v200
  %426 = vmatpush1.msra.mxu0 %v199
  %427 = vmatprep.subr.mxu0 %v202
  %428 = vmatpush1.msra.mxu0 %v201
  %429 = vmatprep.subr.mxu0 %v204
  %430 = vmatpush1.msra.mxu0 %v203
  %431 = vmatprep.subr.mxu0 %v206
  %432 = vmatpush1.msra.mxu0 %v205
  %433 = vmatprep.subr.mxu0 %v208
  %434 = vmatpush1.msra.mxu0 %v207
  %435 = vmatprep.subr.mxu0 %v210
  %436 = vmatpush1.msra.mxu0 %v209
  %437 = vmatprep.subr.mxu0 %v212
  %438 = vmatpush1.msra.mxu0 %v211
  %439 = vmatprep.subr.mxu0 %v214
  %440 = vmatpush1.msra.mxu0 %v213
  %441 = vmatprep.subr.mxu0 %v216
  %442 = vmatpush1.msra.mxu0 %v215
  %443 = vmatprep.subr.mxu0 %v218
  %444 = vmatpush1.msra.mxu0 %v217
  %445 = vmatprep.subr.mxu0 %v220
  %446 = vmatpush1.msra.mxu0 %v219
  %447 = vmatprep.subr.mxu0 %v222
  %448 = vmatpush1.msra.mxu0 %v221
  %449 = vmatprep.subr.mxu0 %v224
  %450 = vmatpush1.msra.mxu0 %v223
  %451 = vmatprep.subr.mxu0 %v226
  %452 = vmatpush1.msra.mxu0 %v225
  %453 = vmatprep.subr.mxu0 %v228
  %454 = vmatpush1.msra.mxu0 %v227
  %455 = vmatprep.subr.mxu0 %v230
  %456 = vmatpush1.msra.mxu0 %v229
  %457 = vmatprep.mubr.f32.mxu0 %v37
  %458 = vmatmul.mubr.f32.gmra.mrb[0].mxu0 %v36
  %v459 = vpop.f32.mrb[0].mxu0
  %v460 = vadd.f32 %v389, %v459
  %v461 = vpop.f32.mrb[0].mxu0
  %v462 = vadd.f32 %v391, %v461
  %463 = vdwg.mxu0
  %464 = vmatprep.subr.mxu0 %v232
  %465 = vmatpush1.msra.mxu0 %v231
  %466 = vmatprep.subr.mxu0 %v234
  %467 = vmatpush1.msra.mxu0 %v233
  %468 = vmatprep.subr.mxu0 0.0
  %469 = vmatpush1.msra.mxu0 0.0
  %470 = vmatprep.subr.mxu0 0.0
  %471 = vmatpush1.msra.mxu0 0.0
  %472 = vmatprep.subr.mxu0 0.0
  %473 = vmatpush1.msra.mxu0 0.0
  %474 = vmatprep.subr.mxu0 0.0
  %475 = vmatpush1.msra.mxu0 0.0
  %476 = vmatprep.subr.mxu0 0.0
  %477 = vmatpush1.msra.mxu0 0.0
  %478 = vmatprep.subr.mxu0 0.0
  %479 = vmatpush1.msra.mxu0 0.0
  %480 = vmatprep.subr.mxu0 0.0
  %481 = vmatpush1.msra.mxu0 0.0
  %482 = vmatprep.subr.mxu0 0.0
  %483 = vmatpush1.msra.mxu0 0.0
  %484 = vmatprep.subr.mxu0 0.0
  %485 = vmatpush1.msra.mxu0 0.0
  %486 = vmatprep.subr.mxu0 0.0
  %487 = vmatpush1.msra.mxu0 0.0
  %488 = vmatprep.subr.mxu0 0.0
  %489 = vmatpush1.msra.mxu0 0.0
  %490 = vmatprep.subr.mxu0 0.0
  %491 = vmatpush1.msra.mxu0 0.0
  %492 = vmatprep.subr.mxu0 0.0
  %493 = vmatpush1.msra.mxu0 0.0
  %494 = vmatprep.subr.mxu0 0.0
  %495 = vmatpush1.msra.mxu0 0.0
  %496 = vmatprep.subr.mxu0 0.0
  %497 = vmatpush1.msra.mxu0 0.0
  %498 = vmatprep.subr.mxu0 0.0
  %499 = vmatpush1.msra.mxu0 0.0
  %500 = vmatprep.subr.mxu0 0.0
  %501 = vmatpush1.msra.mxu0 0.0
  %502 = vmatprep.subr.mxu0 0.0
  %503 = vmatpush1.msra.mxu0 0.0
  %504 = vmatprep.subr.mxu0 0.0
  %505 = vmatpush1.msra.mxu0 0.0
  %506 = vmatprep.subr.mxu0 0.0
  %507 = vmatpush1.msra.mxu0 0.0
  %508 = vmatprep.subr.mxu0 0.0
  %509 = vmatpush1.msra.mxu0 0.0
  %510 = vmatprep.subr.mxu0 0.0
  %511 = vmatpush1.msra.mxu0 0.0
  %512 = vmatprep.subr.mxu0 0.0
  %513 = vmatpush1.msra.mxu0 0.0
  %514 = vmatprep.subr.mxu0 0.0
  %515 = vmatpush1.msra.mxu0 0.0
  %516 = vmatprep.subr.mxu0 0.0
  %517 = vmatpush1.msra.mxu0 0.0
  %518 = vmatprep.subr.mxu0 0.0
  %519 = vmatpush1.msra.mxu0 0.0
  %520 = vmatprep.subr.mxu0 0.0
  %521 = vmatpush1.msra.mxu0 0.0
  %522 = vmatprep.subr.mxu0 0.0
  %523 = vmatpush1.msra.mxu0 0.0
  %524 = vmatprep.subr.mxu0 0.0
  %525 = vmatpush1.msra.mxu0 0.0
  %526 = vmatprep.subr.mxu0 0.0
  %527 = vmatpush1.msra.mxu0 0.0
  %528 = vmatprep.mubr.f32.mxu0 0.0
  %529 = vmatmul.mubr.f32.gmra.mrb[0].mxu0 %v249
  %v530 = vpop.f32.mrb[0].mxu0
  %v531 = vadd.f32 %v460, %v530
  %v532 = vpop.f32.mrb[0].mxu0
  %v533 = vadd.f32 %v462, %v532
  %534 = vdwg.mxu0
  %v535 = vmax.f32 %v531, 0.0
  %v536 = vmax.f32 %v533, 0.0
  %v537 = vld [vmem:[%s3] sm:$0xff]
  %v538 = vld [vmem:[%s3 + $0x8] sm:$0xff]
  %v539 = vld [vmem:[%s3 + $0x10] sm:$0xff]
  %v540 = vld [vmem:[%s3 + $0x18] sm:$0xff]
  %v541 = vld [vmem:[%s3 + $0x20] sm:$0xff]
  %v542 = vld [vmem:[%s3 + $0x28] sm:$0xff]
  %v543 = vld [vmem:[%s3 + $0x30] sm:$0xff]
  %v544 = vld [vmem:[%s3 + $0x38] sm:$0xff]
  %v545 = vld [vmem:[%s3 + $0x40] sm:$0xff]
  %v546 = vld [vmem:[%s3 + $0x48] sm:$0xff]
  %v547 = vld [vmem:[%s3 + $0x50] sm:$0xff]
  %v548 = vld [vmem:[%s3 + $0x58] sm:$0xff]
  %v549 = vld [vmem:[%s3 + $0x60] sm:$0xff]
  %v550 = vld [vmem:[%s3 + $0x68] sm:$0xff]
  %v551 = vld [vmem:[%s3 + $0x70] sm:$0xff]
  %v552 = vld [vmem:[%s3 + $0x78] sm:$0xff]
  %v553 = vld [vmem:[%s3 + $0x80] sm:$0xff]
  %v554 = vld [vmem:[%s3 + $0x88] sm:$0xff]
  %v555 = vld [vmem:[%s3 + $0x90] sm:$0xff]
  %v556 = vld [vmem:[%s3 + $0x98] sm:$0xff]
  %v557 = vld [vmem:[%s3 + $0xa0] sm:$0xff]
  %v558 = vld [vmem:[%s3 + $0xa8] sm:$0xff]
  %v559 = vld [vmem:[%s3 + $0xb0] sm:$0xff]
  %v560 = vld [vmem:[%s3 + $0xb8] sm:$0xff]
  %v561 = vld [vmem:[%s3 + $0xc0] sm:$0xff]
  %v562 = vld [vmem:[%s3 + $0xc8] sm:$0xff]
  %v563 = vld [vmem:[%s3 + $0xd0] sm:$0xff]
  %v564 = vld [vmem:[%s3 + $0xd8] sm:$0xff]
  %v565 = vld [vmem:[%s3 + $0xe0] sm:$0xff]
  %v566 = vld [vmem:[%s3 + $0xe8] sm:$0xff]
  %v567 = vld [vmem:[%s3 + $0xf0] sm:$0xff]
  %v568 = vld [vmem:[%s3 + $0xf8] sm:$0xff]
  %v569 = vld [vmem:[%s4] sm:$0x1]
  %v571 = vlaneseq
  %v572 = vshrl.u32 %v571, 7
  %v573 = vsub.s32 0, %v572
  %v574 = vrot.slane %v569, %v573
  %576 = vmatprep.subr.mxu0 0.0
  %577 = vmatpush1.msra.mxu0 %v537
  %578 = vmatprep.subr.mxu0 0.0
  %579 = vmatpush1.msra.mxu0 %v538
  %580 = vmatprep.subr.mxu0 0.0
  %581 = vmatpush1.msra.mxu0 %v539
  %582 = vmatprep.subr.mxu0 0.0
  %583 = vmatpush1.msra.mxu0 %v540
  %584 = vmatprep.subr.mxu0 0.0
  %585 = vmatpush1.msra.mxu0 %v541
  %586 = vmatprep.subr.mxu0 0.0
  %587 = vmatpush1.msra.mxu0 %v542
  %588 = vmatprep.subr.mxu0 0.0
  %589 = vmatpush1.msra.mxu0 %v543
  %590 = vmatprep.subr.mxu0 0.0
  %591 = vmatpush1.msra.mxu0 %v544
  %592 = vmatprep.subr.mxu0 0.0
  %593 = vmatpush1.msra.mxu0 %v545
  %594 = vmatprep.subr.mxu0 0.0
  %595 = vmatpush1.msra.mxu0 %v546
  %596 = vmatprep.subr.mxu0 0.0
  %597 = vmatpush1.msra.mxu0 %v547
  %598 = vmatprep.subr.mxu0 0.0
  %599 = vmatpush1.msra.mxu0 %v548
  %600 = vmatprep.subr.mxu0 0.0
  %601 = vmatpush1.msra.mxu0 %v549
  %602 = vmatprep.subr.mxu0 0.0
  %603 = vmatpush1.msra.mxu0 %v550
  %604 = vmatprep.subr.mxu0 0.0
  %605 = vmatpush1.msra.mxu0 %v551
  %606 = vmatprep.subr.mxu0 0.0
  %607 = vmatpush1.msra.mxu0 %v552
  %608 = vmatprep.subr.mxu0 0.0
  %609 = vmatpush1.msra.mxu0 %v553
  %610 = vmatprep.subr.mxu0 0.0
  %611 = vmatpush1.msra.mxu0 %v554
  %612 = vmatprep.subr.mxu0 0.0
  %613 = vmatpush1.msra.mxu0 %v555
  %614 = vmatprep.subr.mxu0 0.0
  %615 = vmatpush1.msra.mxu0 %v556
  %616 = vmatprep.subr.mxu0 0.0
  %617 = vmatpush1.msra.mxu0 %v557
  %618 = vmatprep.subr.mxu0 0.0
  %619 = vmatpush1.msra.mxu0 %v558
  %620 = vmatprep.subr.mxu0 0.0
  %621 = vmatpush1.msra.mxu0 %v559
  %622 = vmatprep.subr.mxu0 0.0
  %623 = vmatpush1.msra.mxu0 %v560
  %624 = vmatprep.subr.mxu0 0.0
  %625 = vmatpush1.msra.mxu0 %v561
  %626 = vmatprep.subr.mxu0 0.0
  %627 = vmatpush1.msra.mxu0 %v562
  %628 = vmatprep.subr.mxu0 0.0
  %629 = vmatpush1.msra.mxu0 %v563
  %630 = vmatprep.subr.mxu0 0.0
  %631 = vmatpush1.msra.mxu0 %v564
  %632 = vmatprep.subr.mxu0 0.0
  %633 = vmatpush1.msra.mxu0 %v565
  %634 = vmatprep.subr.mxu0 0.0
  %635 = vmatpush1.msra.mxu0 %v566
  %636 = vmatprep.subr.mxu0 0.0
  %637 = vmatpush1.msra.mxu0 %v567
  %638 = vmatprep.subr.mxu0 0.0
  %639 = vmatpush1.msra.mxu0 %v568
  %640 = vmatprep.mubr.f32.mxu0 %v536
  %641 = vmatmul.mubr.f32.gmra.mrb[0].mxu0 %v535
  %v642 = vpop.f32.mrb[0].mxu0
  %v643 = vadd.f32 %v574, %v642
  %v644 = vpop.f32.mrb[0].mxu0
  %645 = vdwg.mxu0
  %v646 = vmax.f32 %v643, 0.0
  %v647 = vld [vmem:[%s5] sm:$0xff]
  %v648 = vld [vmem:[%s5 + $0x8] sm:$0xff]
  %v649 = vld [vmem:[%s5 + $0x10] sm:$0xff]
  %v650 = vld [vmem:[%s5 + $0x18] sm:$0xff]
  %v651 = vld [vmem:[%s5 + $0x20] sm:$0xff]
  %v652 = vld [vmem:[%s5 + $0x28] sm:$0xff]
  %v653 = vld [vmem:[%s5 + $0x30] sm:$0xff]
  %v654 = vld [vmem:[%s5 + $0x38] sm:$0xff]
  %v655 = vld [vmem:[%s5 + $0x40] sm:$0xff]
  %v656 = vld [vmem:[%s5 + $0x48] sm:$0xff]
  %v657 = vld [vmem:[%s5 + $0x50] sm:$0xff]
  %v658 = vld [vmem:[%s5 + $0x58] sm:$0xff]
  %v659 = vld [vmem:[%s5 + $0x60] sm:$0xff]
  %v660 = vld [vmem:[%s5 + $0x68] sm:$0xff]
  %v661 = vld [vmem:[%s5 + $0x70] sm:$0xff]
  %v662 = vld [vmem:[%s5 + $0x78] sm:$0xff]
  %v663 = vld [vmem:[%s6] sm:$0x1]
  %v665 = vlaneseq
  %v666 = vshrl.u32 %v665, 7
  %v667 = vsub.s32 0, %v666
  %v668 = vrot.slane %v663, %v667
  %670 = vmatprep.subr.mxu0 0.0
  %671 = vmatpush1.msra.mxu0 %v647
  %672 = vmatprep.subr.mxu0 0.0
  %673 = vmatpush1.msra.mxu0 %v648
  %674 = vmatprep.subr.mxu0 0.0
  %675 = vmatpush1.msra.mxu0 %v649
  %676 = vmatprep.subr.mxu0 0.0
  %677 = vmatpush1.msra.mxu0 %v650
  %678 = vmatprep.subr.mxu0 0.0
  %679 = vmatpush1.msra.mxu0 %v651
  %680 = vmatprep.subr.mxu0 0.0
  %681 = vmatpush1.msra.mxu0 %v652
  %682 = vmatprep.subr.mxu0 0.0
  %683 = vmatpush1.msra.mxu0 %v653
  %684 = vmatprep.subr.mxu0 0.0
  %685 = vmatpush1.msra.mxu0 %v654
  %686 = vmatprep.subr.mxu0 0.0
  %687 = vmatpush1.msra.mxu0 %v655
  %688 = vmatprep.subr.mxu0 0.0
  %689 = vmatpush1.msra.mxu0 %v656
  %690 = vmatprep.subr.mxu0 0.0
  %691 = vmatpush1.msra.mxu0 %v657
  %692 = vmatprep.subr.mxu0 0.0
  %693 = vmatpush1.msra.mxu0 %v658
  %694 = vmatprep.subr.mxu0 0.0
  %695 = vmatpush1.msra.mxu0 %v659
  %696 = vmatprep.subr.mxu0 0.0
  %697 = vmatpush1.msra.mxu0 %v660
  %698 = vmatprep.subr.mxu0 0.0
  %699 = vmatpush1.msra.mxu0 %v661
  %700 = vmatprep.subr.mxu0 0.0
  %701 = vmatpush1.msra.mxu0 %v662
  %702 = vmatprep.subr.mxu0 0.0
  %703 = vmatpush1.msra.mxu0 0.0
  %704 = vmatprep.subr.mxu0 0.0
  %705 = vmatpush1.msra.mxu0 0.0
  %706 = vmatprep.subr.mxu0 0.0
  %707 = vmatpush1.msra.mxu0 0.0
  %708 = vmatprep.subr.mxu0 0.0
  %709 = vmatpush1.msra.mxu0 0.0
  %710 = vmatprep.subr.mxu0 0.0
  %711 = vmatpush1.msra.mxu0 0.0
  %712 = vmatprep.subr.mxu0 0.0
  %713 = vmatpush1.msra.mxu0 0.0
  %714 = vmatprep.subr.mxu0 0.0
  %715 = vmatpush1.msra.mxu0 0.0
  %716 = vmatprep.subr.mxu0 0.0
  %717 = vmatpush1.msra.mxu0 0.0
  %718 = vmatprep.subr.mxu0 0.0
  %719 = vmatpush1.msra.mxu0 0.0
  %720 = vmatprep.subr.mxu0 0.0
  %721 = vmatpush1.msra.mxu0 0.0
  %722 = vmatprep.subr.mxu0 0.0
  %723 = vmatpush1.msra.mxu0 0.0
  %724 = vmatprep.subr.mxu0 0.0
  %725 = vmatpush1.msra.mxu0 0.0
  %726 = vmatprep.subr.mxu0 0.0
  %727 = vmatpush1.msra.mxu0 0.0
  %728 = vmatprep.subr.mxu0 0.0
  %729 = vmatpush1.msra.mxu0 0.0
  %730 = vmatprep.subr.mxu0 0.0
  %731 = vmatpush1.msra.mxu0 0.0
  %732 = vmatprep.subr.mxu0 0.0
  %733 = vmatpush1.msra.mxu0 0.0
  %734 = vmatprep.mubr.f32.mxu0 0.0
  %735 = vmatmul.mubr.f32.gmra.mrb[0].mxu0 %v646
  %v736 = vpop.f32.mrb[0].mxu0
  %v737 = vadd.f32 %v668, %v736
  %v738 = vpop.f32.mrb[0].mxu0
  %739 = vdwg.mxu0
  %v740 = vmax.f32 %v737, 0.0
  %v741 = vld [vmem:[%s7] sm:$0xff]
  %v742 = vld [vmem:[%s7 + $0x8] sm:$0xff]
  %v743 = vld [vmem:[%s7 + $0x10] sm:$0xff]
  %v744 = vld [vmem:[%s7 + $0x18] sm:$0xff]
  %v745 = vld [vmem:[%s7 + $0x20] sm:$0xff]
  %v746 = vld [vmem:[%s7 + $0x28] sm:$0xff]
  %v747 = vld [vmem:[%s7 + $0x30] sm:$0xff]
  %v748 = vld [vmem:[%s7 + $0x38] sm:$0xff]
  %v749 = vld [vmem:[%s7 + $0x40] sm:$0xff]
  %v750 = vld [vmem:[%s7 + $0x48] sm:$0xff]
  %v751 = vld [vmem:[%s7 + $0x50] sm:$0xff]
  %v752 = vld [vmem:[%s7 + $0x58] sm:$0xff]
  %v753 = vld [vmem:[%s7 + $0x60] sm:$0xff]
  %v754 = vld [vmem:[%s7 + $0x68] sm:$0xff]
  %v755 = vld [vmem:[%s7 + $0x70] sm:$0xff]
  %v756 = vld [vmem:[%s7 + $0x78] sm:$0xff]
  %v757 = vld [vmem:[%s8] sm:$0x1]
  %v759 = vlaneseq
  %v760 = vshrl.u32 %v759, 7
  %v761 = vsub.s32 0, %v760
  %v762 = vrot.slane %v757, %v761
  %764 = vmatprep.subr.mxu0 0.0
  %765 = vmatpush1.msra.mxu0 %v741
  %766 = vmatprep.subr.mxu0 0.0
  %767 = vmatpush1.msra.mxu0 %v742
  %768 = vmatprep.subr.mxu0 0.0
  %769 = vmatpush1.msra.mxu0 %v743
  %770 = vmatprep.subr.mxu0 0.0
  %771 = vmatpush1.msra.mxu0 %v744
  %772 = vmatprep.subr.mxu0 0.0
  %773 = vmatpush1.msra.mxu0 %v745
  %774 = vmatprep.subr.mxu0 0.0
  %775 = vmatpush1.msra.mxu0 %v746
  %776 = vmatprep.subr.mxu0 0.0
  %777 = vmatpush1.msra.mxu0 %v747
  %778 = vmatprep.subr.mxu0 0.0
  %779 = vmatpush1.msra.mxu0 %v748
  %780 = vmatprep.subr.mxu0 0.0
  %781 = vmatpush1.msra.mxu0 %v749
  %782 = vmatprep.subr.mxu0 0.0
  %783 = vmatpush1.msra.mxu0 %v750
  %784 = vmatprep.subr.mxu0 0.0
  %785 = vmatpush1.msra.mxu0 %v751
  %786 = vmatprep.subr.mxu0 0.0
  %787 = vmatpush1.msra.mxu0 %v752
  %788 = vmatprep.subr.mxu0 0.0
  %789 = vmatpush1.msra.mxu0 %v753
  %790 = vmatprep.subr.mxu0 0.0
  %791 = vmatpush1.msra.mxu0 %v754
  %792 = vmatprep.subr.mxu0 0.0
  %793 = vmatpush1.msra.mxu0 %v755
  %794 = vmatprep.subr.mxu0 0.0
  %795 = vmatpush1.msra.mxu0 %v756
  %796 = vmatprep.subr.mxu0 0.0
  %797 = vmatpush1.msra.mxu0 0.0
  %798 = vmatprep.subr.mxu0 0.0
  %799 = vmatpush1.msra.mxu0 0.0
  %800 = vmatprep.subr.mxu0 0.0
  %801 = vmatpush1.msra.mxu0 0.0
  %802 = vmatprep.subr.mxu0 0.0
  %803 = vmatpush1.msra.mxu0 0.0
  %804 = vmatprep.subr.mxu0 0.0
  %805 = vmatpush1.msra.mxu0 0.0
  %806 = vmatprep.subr.mxu0 0.0
  %807 = vmatpush1.msra.mxu0 0.0
  %808 = vmatprep.subr.mxu0 0.0
  %809 = vmatpush1.msra.mxu0 0.0
  %810 = vmatprep.subr.mxu0 0.0
  %811 = vmatpush1.msra.mxu0 0.0
  %812 = vmatprep.subr.mxu0 0.0
  %813 = vmatpush1.msra.mxu0 0.0
  %814 = vmatprep.subr.mxu0 0.0
  %815 = vmatpush1.msra.mxu0 0.0
  %816 = vmatprep.subr.mxu0 0.0
  %817 = vmatpush1.msra.mxu0 0.0
  %818 = vmatprep.subr.mxu0 0.0
  %819 = vmatpush1.msra.mxu0 0.0
  %820 = vmatprep.subr.mxu0 0.0
  %821 = vmatpush1.msra.mxu0 0.0
  %822 = vmatprep.subr.mxu0 0.0
  %823 = vmatpush1.msra.mxu0 0.0
  %824 = vmatprep.subr.mxu0 0.0
  %825 = vmatpush1.msra.mxu0 0.0
  %826 = vmatprep.subr.mxu0 0.0
  %827 = vmatpush1.msra.mxu0 0.0
  %828 = vmatprep.mubr.f32.mxu0 0.0
  %829 = vmatmul.mubr.f32.gmra.mrb[0].mxu0 %v740
  %v830 = vpop.f32.mrb[0].mxu0
  %v831 = vadd.f32 %v762, %v830
  %v832 = vpop.f32.mrb[0].mxu0
  %833 = vdwg.mxu0
  %v834 = vlaneseq
  %v835 = vand.u32 %v834, 127
  %vm836 = vcmp.lt.s32.totalorder %v835, 10
  %v837 = vsel %vm836, %v831, -1e+30
  %838 = vmax.xlane.f32.xlu0 %v837
  %v839 = vpop.xlane.xlu0 %838
  %v840 = vsub.f32 %v837, %v839
  %v841 = vmul.f32 %v840, 1.442695
  %v842 = vpow.pop %v841
  %843 = vadd.xlane.f32.xlu0 %v842
  %v844 = vpop.xlane.xlu0 %843
  %v845 = vrcp.pop %v844
  %v846 = vmul.f32 %v842, %v845
  %847 = vst [vmem:[%s9] sm:$0xff] %v846
  // Predicated region
  $region38: #{net_forward.1} parent=0 // pred_check
    _
  $region39: #{net_forward.1} parent=0 // pred_check_branch
    %849 = sbr.rel (0) target = $region41
  $region40: #{net_forward.1} parent=0 // pred_region
    _
  $region41: #{net_forward.1} parent=0 // pred_fallthru
    _
  // Predicated region
  $region42: #{net_forward.1} parent=0 // pred_check
    _
  $region43: #{net_forward.1} parent=0 // pred_check_branch
    %851 = sbr.rel (0) target = $region45
  $region44: #{net_forward.1} parent=0 // pred_region
    _
  $region45: #{net_forward.1} parent=0 // pred_fallthru
    _

</llo_original>
